<compile_context>
chip_gen: v7x
topology: tpu7x:2x2x1
jax: 0.10.0
libtpu: 0.0.40
codegen_flags: <defaults>
</compile_context>

<pallas_src>
import functools

import numpy as np
import jax
import jax.numpy as jnp
from jax.experimental import pallas as pl
from jax.experimental.pallas import tpu as pltpu

_NEG = -1.0e30      # additive-mask sentinel for padded neighbor slots
_TE = 16            # entries per grid step (review: batch 8-32 entries per step)


# ------------------------------------------------------------------ Pallas kernel
def _softmax_blend_kernel(alpha, beta, use_prior, *refs):
    """LeakyReLU + masked softmax over the neighbor (lane) axis + optional beta-blend.

    Block layout is lane-dense: rows = TE*nheads (sublanes), cols = max_nbr (lanes).
    Row r of a block corresponds to (entry e = r // nheads, head h = r % nheads).
    """
    if use_prior:
        s_ref, prior_ref, o_ref = refs
    else:
        s_ref, o_ref = refs
        prior_ref = None

    s_in = s_ref[...]                                   # (TE*nh, max_nbr) f32
    pad = s_in <= (_NEG * 0.5)                          # sentinel detection (robust to alpha == 0)
    s = jnp.where(s_in >= 0.0, s_in, alpha * s_in)      # LeakyReLU
    s = jnp.where(pad, _NEG, s)

    mx = jnp.max(s, axis=-1, keepdims=True)
    p = jnp.exp(s - mx)
    p = jnp.where(pad, 0.0, p)
    denom = jnp.maximum(jnp.sum(p, axis=-1, keepdims=True), 1e-30)   # guard all-padded rows
    inv = pl.reciprocal(denom, approx=True)             # EUP slot (essentially free)
    inv = inv * (2.0 - denom * inv)                      # one Newton step -> ~f32 accuracy
    att = p * inv

    # TODO(synk): nn.Dropout is treated as inference-mode identity (training-mode dropout
    # would need pltpu.prng_seed + pltpu.stateful_bernoulli here).
    if use_prior:
        att = (1.0 - beta) * att + beta * prior_ref[...]
    o_ref[...] = att


# ------------------------------------------------------------------ wrapper
def attention_layer_wosubgraph_forward(feats, subgraphs, attentions, a_params, *,
                                       ntype, nheads, alpha, beta):
    """JAX/Pallas equivalent of AttentionLayer_wosubgraph.forward (inference-mode dropout).

    Returns (attentions_new, neighbors) in the same (col, sorted-unique-node) order as the
    PyTorch module; attentions_new[i] is a (nheads, len(neighbors[i])) numpy array.
    """
    feats = jnp.asarray(feats, jnp.float32)
    n_nodes, hid = feats.shape
    sub = np.asarray(subgraphs)
    assert sub.shape[1] == ntype

    # ---- phase 1: data-dependent structure (torch.unique) -> host-side numpy ------------
    cols, nodes, nbr_lists = [], [], []
    for col in range(ntype):
        other = [c for c in range(ntype) if c != col]
        col_vals = sub[:, col]
        for node in np.unique(col_vals):
            nbr = np.unique(sub[col_vals == node][:, other])
            cols.append(col)
            nodes.append(int(node))
            nbr_lists.append(nbr.astype(np.int32))
    n_entries = len(nbr_lists)
    counts_np = np.array([len(x) for x in nbr_lists], np.int32)
    # Every entry has >= 1 neighbor by construction (ntype >= 2); padded slots use neighbor
    # id 0 (always a valid feats row) and are masked with the _NEG sentinel before softmax.
    max_nbr = max(8, int(pl.next_power_of_2(int(counts_np.max()))))   # pow2 bucket (recompile hygiene)
    nbr_ids_np = np.zeros((n_entries, max_nbr), np.int32)
    for e, nbr in enumerate(nbr_lists):
        nbr_ids_np[e, :len(nbr)] = nbr

    col_ids = jnp.asarray(np.array(cols, np.int32))
    node_ids = jnp.asarray(np.array(nodes, np.int32))
    nbr_ids = jnp.asarray(nbr_ids_np)
    counts = jnp.asarray(counts_np)

    # ---- phase 2: XLA pre-pass — project once, gather per entry, build lane-dense scores -
    a_stack = jnp.stack([jnp.asarray(a, jnp.float32) for a in a_params])   # (ntype, nh, 3H)
    w0 = a_stack[:, :, :hid]            # node-side
    w1 = a_stack[:, :, hid:2 * hid]     # neighbor-side
    w2 = a_stack[:, :, 2 * hid:]        # global-side

    kp = jnp.einsum('nd,thd->nth', feats, w1)          # neighbor keys (N, ntype, nh)
    g = jnp.mean(feats, axis=0)
    gp = jnp.einsum('d,thd->th', g, w2)                # global bias (ntype, nh)

    # node_repeat rows, replicating feats[node].repeat_interleave(len).reshape(len, -1)
    flat = (jnp.arange(max_nbr, dtype=jnp.int32)[:, None] * hid
            + jnp.arange(hid, dtype=jnp.int32)[None, :])                       # (M, H)
    idx = jnp.minimum(flat[None, :, :] // counts[:, None, None], hid - 1)      # (E, M, H)
    feats_nodes = feats[node_ids]                                              # (E, H)
    node_rep = feats_nodes[jnp.arange(n_entries)[:, None, None], idx]          # (E, M, H)

    t1 = jnp.einsum('ekd,ehd->ehk', node_rep, w0[col_ids])                     # (E, nh, M)
    kg = kp[nbr_ids, col_ids[:, None]]                                         # (E, M, nh)
    lin = t1 + jnp.swapaxes(kg, 1, 2) + gp[col_ids][:, :, None]                # (E, nh, M)

    valid = jnp.arange(max_nbr, dtype=jnp.int32)[None, None, :] < counts[:, None, None]
    scores = jnp.where(valid, lin, _NEG)

    # pad the entry axis to a multiple of TE and flatten to a lane-dense 2-D slab
    te = _TE
    e_pad = ((n_entries + te - 1) // te) * te
    scores = jnp.pad(scores, ((0, e_pad - n_entries), (0, 0), (0, 0)), constant_values=_NEG)
    scores2d = scores.reshape(e_pad * nheads, max_nbr)

    # ---- previous attentions (beta-blend) ------------------------------------------------
    use_prior = attentions is not None and len(attentions) > 0
    args = [scores2d]
    in_specs = [pl.BlockSpec((te * nheads, max_nbr), lambda i: (i, 0))]
    if use_prior:
        assert len(attentions) == n_entries
        prior_np = np.zeros((e_pad, nheads, max_nbr), np.float32)
        for e in range(n_entries):
            prev = np.asarray(attentions[e], np.float32)        # (nh, len)
            prior_np[e, :, :prev.shape[1]] = prev
        args.append(jnp.asarray(prior_np.reshape(e_pad * nheads, max_nbr)))
        in_specs.append(pl.BlockSpec((te * nheads, max_nbr), lambda i: (i, 0)))

    # VMEM limit from actual block sizes (double-buffered streams + headroom, v7x-safe cap)
    blk_bytes = te * nheads * max_nbr * 4
    n_streams = len(args) + 1
    vmem_limit = int(min(max(8 << 20, 4 * n_streams * blk_bytes + (1 << 20)), 48 << 20))

    out2d = pl.pallas_call(
        functools.partial(_softmax_blend_kernel, float(alpha), float(beta), use_prior),
        out_shape=jax.ShapeDtypeStruct((e_pad * nheads, max_nbr), jnp.float32),
        grid=(e_pad // te,),
        in_specs=in_specs,
        out_specs=pl.BlockSpec((te * nheads, max_nbr), lambda i: (i, 0)),
        compiler_params=pltpu.CompilerParams(
            dimension_semantics=("parallel",),
            vmem_limit_bytes=vmem_limit),
    )(*args)

    # single device->host copy; per-entry slicing is pure numpy (no per-entry dispatches)
    out_np = np.asarray(out2d).reshape(e_pad, nheads, max_nbr)
    attentions_new = [out_np[e, :, :int(counts_np[e])] for e in range(n_entries)]
    neighbors = list(nbr_lists)
    return attentions_new, neighbors


# ------------------------------------------------------------------ numpy reference
def _reference_forward(feats, subgraphs, a_params, attentions, *, ntype, alpha, beta):
    """Pure numpy transcription of AttentionLayer_wosubgraph.forward (eval-mode dropout)."""
    x = np.asarray(feats, np.float32)
    sub = np.asarray(subgraphs)
    g = x.mean(axis=0)
    combos, cols_used, neighbors = [], [], []
    for col in range(ntype):
        other = [c for c in range(ntype) if c != col]
        col_vals = sub[:, col]
        for node in np.unique(col_vals):
            nbr = np.unique(sub[col_vals == node][:, other])
            neighbors.append(nbr)
            k = len(nbr)
            node_repeat = np.repeat(x[node], k).reshape(k, -1)   # == repeat_interleave
            combo = np.concatenate([node_repeat, x[nbr],
                                    np.tile(g, k).reshape(k, -1)], axis=1)
            combos.append(combo)
            cols_used.append(col)
    att_temp = []
    for combo, col in zip(combos, cols_used):
        a_mat = np.asarray(a_params[col], np.float32)            # (nheads, 3H)
        temp = (combo @ a_mat.T).T                                # (nheads, k)
        temp = np.where(temp >= 0, temp, alpha * temp)            # LeakyReLU
        temp = temp - temp.max(axis=1, keepdims=True)
        temp = np.exp(temp)
        temp = temp / temp.sum(axis=1, keepdims=True)             # softmax over neighbors
        att_temp.append(temp)                                     # dropout: identity (eval)
    if not attentions:
        att_new = att_temp
    else:
        att_new = [(1.0 - beta) * att_temp[i] + beta * np.asarray(attentions[i], np.float32)
                   for i in range(len(attentions))]
    return att_new, neighbors


# ------------------------------------------------------------------ demo / test
if __name__ == "__main__":
    NTYPE = 4
    NHEADS = 4
    HIDDEN = 32
    N_SUBGRAPHS = 8
    N_NODES = 16
    ALPHA = 0.2
    BETA = 0.3

    key = jax.random.PRNGKey(0)
    k_feat, k_sub, *k_a = jax.random.split(key, 2 + NTYPE)
    feats = jax.random.normal(k_feat, (N_NODES, HIDDEN), dtype=jnp.float32)
    subgraphs = jax.random.randint(k_sub, (N_SUBGRAPHS, NTYPE), 0, N_NODES, dtype=jnp.int32)
    a_params = [0.2 * jax.random.normal(k_a[i], (NHEADS, 3 * HIDDEN), dtype=jnp.float32)
                for i in range(NTYPE)]

    fwd = functools.partial(attention_layer_wosubgraph_forward,
                            ntype=NTYPE, nheads=NHEADS, alpha=ALPHA, beta=BETA)

    # pass 1: no previous attentions (attentions == [])
    att1, nbrs1 = fwd(feats, subgraphs, None, a_params)
    att1 = jax.block_until_ready(att1)
    ref1, rnbrs1 = _reference_forward(feats, subgraphs, a_params, None,
                                      ntype=NTYPE, alpha=ALPHA, beta=BETA)
    assert len(att1) == len(ref1)
    for a, rref, nb, rnb in zip(att1, ref1, nbrs1, rnbrs1):
        assert np.array_equal(np.asarray(nb), rnb)
        assert a.shape == rref.shape
        np.testing.assert_allclose(np.asarray(a), rref, atol=1e-4, rtol=1e-4)

    # pass 2: beta-blend with previous attentions
    att2, _ = fwd(feats, subgraphs, att1, a_params)
    att2 = jax.block_until_ready(att2)
    ref2, _ = _reference_forward(feats, subgraphs, a_params,
                                 [np.asarray(a) for a in att1],
                                 ntype=NTYPE, alpha=ALPHA, beta=BETA)
    for a, rref in zip(att2, ref2):
        np.testing.assert_allclose(np.asarray(a), rref, atol=1e-4, rtol=1e-4)

    print("KERNEL_OK")
</pallas_src>

<mosaic_0001>
module attributes {stable_mosaic.version = 11 : i64} {
  func.func @_softmax_blend_kernel(%arg0: i32, %arg1: memref<64x8xf32, #tpu.memory_space<vmem>>, %arg2: memref<64x8xf32, #tpu.memory_space<vmem>>) attributes {dimension_semantics = [#tpu.dimension_semantics<parallel>], iteration_bounds = array<i64: 2>, scalar_prefetch = 0 : i64, scratch_operands = 0 : i64, tpu.core_type = #tpu.core_type<tc>, window_params = [{transform_indices = @transform_0, window_bounds = array<i64: 64, 8>}, {transform_indices = @transform_1, window_bounds = array<i64: 64, 8>}]} {
    %c0 = arith.constant 0 : index
    %c0_0 = arith.constant 0 : index
    %0 = vector.load %arg1[%c0, %c0_0] : memref<64x8xf32, #tpu.memory_space<vmem>>, vector<64x8xf32>
    %cst = arith.constant -5.000000e+29 : f32
    %1 = vector.broadcast %cst : f32 to vector<64x8xf32>
    %2 = arith.cmpf ole, %0, %1 : vector<64x8xf32>
    %cst_1 = arith.constant 0.000000e+00 : f32
    %3 = vector.broadcast %cst_1 : f32 to vector<64x8xf32>
    %4 = arith.cmpf oge, %0, %3 : vector<64x8xf32>
    %cst_2 = arith.constant 2.000000e-01 : f32
    %5 = vector.broadcast %cst_2 : f32 to vector<64x8xf32>
    %6 = arith.mulf %5, %0 : vector<64x8xf32>
    %7 = arith.select %4, %0, %6 : vector<64x8xi1>, vector<64x8xf32>
    %cst_3 = arith.constant -1.000000e+30 : f32
    %8 = vector.broadcast %cst_3 : f32 to vector<64x8xf32>
    %9 = arith.select %2, %8, %7 : vector<64x8xi1>, vector<64x8xf32>
    %cst_4 = arith.constant dense<0xFF800000> : vector<64xf32>
    %10 = vector.multi_reduction <maximumf>, %9, %cst_4 [1] : vector<64x8xf32> to vector<64xf32>
    %11 = vector.shape_cast %10 : vector<64xf32> to vector<64x1xf32>
    %12 = vector.broadcast %11 : vector<64x1xf32> to vector<64x8xf32>
    %13 = arith.subf %9, %12 : vector<64x8xf32>
    %14 = math.exp %13 : vector<64x8xf32>
    %cst_5 = arith.constant 0.000000e+00 : f32
    %15 = vector.broadcast %cst_5 : f32 to vector<64x8xf32>
    %16 = arith.select %2, %15, %14 : vector<64x8xi1>, vector<64x8xf32>
    %cst_6 = arith.constant dense<0.000000e+00> : vector<64xf32>
    %17 = vector.multi_reduction <add>, %16, %cst_6 [1] : vector<64x8xf32> to vector<64xf32>
    %18 = vector.shape_cast %17 : vector<64xf32> to vector<64x1xf32>
    %cst_7 = arith.constant 1.000000e-30 : f32
    %19 = vector.broadcast %cst_7 : f32 to vector<64x1xf32>
    %20 = arith.maximumf %18, %19 : vector<64x1xf32>
    %21 = tpu.reciprocal %20 {approx = true} : vector<64x1xf32> -> vector<64x1xf32>
    %22 = arith.mulf %20, %21 : vector<64x1xf32>
    %cst_8 = arith.constant 2.000000e+00 : f32
    %23 = vector.broadcast %cst_8 : f32 to vector<64x1xf32>
    %24 = arith.subf %23, %22 : vector<64x1xf32>
    %25 = arith.mulf %21, %24 : vector<64x1xf32>
    %26 = vector.broadcast %25 : vector<64x1xf32> to vector<64x8xf32>
    %27 = arith.mulf %16, %26 : vector<64x8xf32>
    %c0_9 = arith.constant 0 : index
    %c0_10 = arith.constant 0 : index
    %28 = vector.load %arg2[%c0_9, %c0_10] : memref<64x8xf32, #tpu.memory_space<vmem>>, vector<64x8xf32>
    tpu.vector_store %arg2[%c0_9, %c0_10], %27 {strides = array<i32>} : memref<64x8xf32, #tpu.memory_space<vmem>>, vector<64x8xf32>,
    return
  }
  func.func @transform_0(%arg0: i32) -> (i32, i32) {
    %c0_i32 = arith.constant 0 : i32
    %c0_i32_0 = arith.constant 0 : i32
    return %arg0, %c0_i32 : i32, i32
  }
  func.func @transform_1(%arg0: i32) -> (i32, i32) {
    %c0_i32 = arith.constant 0 : i32
    %c0_i32_0 = arith.constant 0 : i32
    return %arg0, %c0_i32 : i32, i32
  }
}

</mosaic_0001>

<llo_original>
// kernel: tpu_custom_call.1
$region0: #{tpu_custom_call.1}
  #allocation0 [shape = 'u32[]', space=smem, size = 0x4, offset = 0x4, fixed_abs, tag = 'smem constant byte address 0x4 - core index']
  #allocation1 [shape = 'u32[144,128]{1,0:T(1,128)}', space=vmem, size = 0x12000, scoped, tag = 'internal scratch']
  %s0 = inlined_call_operand.vmem [shape: f32[128,8], index: 0, kind: input, shape index: {}]
  %s1 = inlined_call_operand.vmem [shape: f32[128,8], index: 1, kind: output, shape index: {}]
  %s2 = sld [smem:[#allocation0]]
  $region37: #{tpu_custom_call.1} parent=0
    _
  %s4 = ssub.s32 1, %s2
  %s5 = scalar_select 0, %s4, %s2
  loop: start=0, step=1, limit=4
  $region2: #{tpu_custom_call.1} parent=0 // loop_pre_header
    _
  $region3: #{tpu_custom_call.1} parent=0 // loop_header
    %s7 = sphi 0, %s11
    %p8 = scmp.ge.s32.totalorder %s7, 4
    %s17 = sphi 0, %s19
    %s20 = sphi 0, %s17
    %s21 = sphi 0, %s20
    %s37 = sphi 0, %s21
    %s43 = sphi 0, %s45
    %s46 = sphi 0, %s43
    %s47 = sphi 0, %s46
    %s63 = sphi 0, %s47
  $region4: #{tpu_custom_call.1} parent=0 // loop_header_branch
    %10 = sbr.rel (%p8) target = $region8
  $region5: #{tpu_custom_call.1} parent=0 // loop_body
    %s12 = ssub.s32 %s7, 1
    %s13 = ssub.s32 %s7, 2
    %s14 = sadd.s32 %s7, 1
    %s15 = ssub.s32 %s7, %s14
    %p16 = scmp.eq.s32.totalorder %s15, 0
    %s18 = sadd.s32 %s17, 1
    %s19 = scalar_select %p16, %s17, %s18
    %p22 = pneg %p16
    %p23 = scmp.eq.s32.totalorder %s7, 1
    %p24 = por %p22, %p23
    %p25 = scmp.ne.s32.totalorder %s17, %s20
    %p26 = scmp.eq.s32.totalorder %s7, 0
    %p27 = por %p25, %p26
    %p28 = scmp.ne.s32.totalorder %s17, %s20
    %p29 = scmp.eq.s32.totalorder %s12, 1
    %p30 = por %p28, %p29
    %p31 = scmp.ne.s32.totalorder %s20, %s21
    %p32 = scmp.eq.s32.totalorder %s12, 0
    %p33 = por %p31, %p32
    %p34 = scmp.ne.s32.totalorder %s20, %s21
    %p35 = scmp.eq.s32.totalorder %s13, 1
    %p36 = por %p34, %p35
    %p38 = scmp.ne.s32.totalorder %s21, %s37
    %p39 = scmp.eq.s32.totalorder %s13, 0
    %p40 = por %p38, %p39
    %s41 = ssub.s32 %s7, %s14
    %p42 = scmp.eq.s32.totalorder %s41, 0
    %s44 = sadd.s32 %s43, 1
    %s45 = scalar_select %p42, %s43, %s44
    %p48 = pneg %p42
    %p49 = scmp.eq.s32.totalorder %s7, 1
    %p50 = por %p48, %p49
    %p51 = scmp.ne.s32.totalorder %s43, %s46
    %p52 = scmp.eq.s32.totalorder %s7, 0
    %p53 = por %p51, %p52
    %p54 = scmp.ne.s32.totalorder %s43, %s46
    %p55 = scmp.eq.s32.totalorder %s12, 1
    %p56 = por %p54, %p55
    %p57 = scmp.ne.s32.totalorder %s46, %s47
    %p58 = scmp.eq.s32.totalorder %s12, 0
    %p59 = por %p57, %p58
    %p60 = scmp.ne.s32.totalorder %s46, %s47
    %p61 = scmp.eq.s32.totalorder %s13, 1
    %p62 = por %p60, %p61
    %p64 = scmp.ne.s32.totalorder %s47, %s63
    %p65 = scmp.eq.s32.totalorder %s13, 0
    %p66 = por %p64, %p65
    %p67 = scmp.le.s32.totalorder 1, %s7
    %p68 = scmp.lt.s32.totalorder %s7, 3
    %p69 = pnand %p67, %p68
    %p70 = pneg %p69
    // Predicated region
    $region9: #{tpu_custom_call.1} parent=5 // pred_check
      _
    $region10: #{tpu_custom_call.1} parent=5 // pred_check_branch
      %72 = sbr.rel (%p69) target = $region12
    $region11: #{tpu_custom_call.1} parent=5 // pred_region
      %s73 = ssub.s32 %s7, 1
    $region12: #{tpu_custom_call.1} parent=5 // pred_fallthru
      _
    %p74 = scmp.lt.s32.totalorder %s7, 2
    // Predicated region
    $region13: #{tpu_custom_call.1} parent=5 // pred_check
      %p75 = pneg %p74
    $region14: #{tpu_custom_call.1} parent=5 // pred_check_branch
      %77 = sbr.rel (%p75) target = $region16
    $region15: #{tpu_custom_call.1} parent=5 // pred_region
      // Predicated region
      $region17: #{tpu_custom_call.1} parent=15 // pred_check
        %p78 = pneg %p27
      $region18: #{tpu_custom_call.1} parent=15 // pred_check_branch
        %80 = sbr.rel (%p78) target = $region20
      $region19: #{tpu_custom_call.1} parent=15 // pred_region
        %s81 = smul.u32 8, %s7
        %p82 = scmp.lt.s32.totalorder %s81, 15
        %s83 = scalar_select %p82, %s81, 15
        %s84 = smul.addr %s83, 8
        %s85 = scalar_lea.vmem %s0, %s84
        %s86 = smul.u32 8, %s7
      $region20: #{tpu_custom_call.1} parent=15 // pred_fallthru
        _
    $region16: #{tpu_custom_call.1} parent=5 // pred_fallthru
      _
    %p87 = scmp.le.s32.totalorder 1, %s7
    %p88 = scmp.lt.s32.totalorder %s7, 3
    %p89 = pnand %p87, %p88
    %p90 = pneg %p89
    // Predicated region
    $region21: #{tpu_custom_call.1} parent=5 // pred_check
      _
    $region22: #{tpu_custom_call.1} parent=5 // pred_check_branch
      %92 = sbr.rel (%p89) target = $region24
    $region23: #{tpu_custom_call.1} parent=5 // pred_region
      %s93 = ssub.s32 %s7, 1
      %s94 = smul.u32 8, %s12
      %p95 = scmp.lt.s32.totalorder %s94, 15
      %s96 = scalar_select %p95, %s94, 15
      %s97 = smul.addr %s96, 8
      %s98 = scalar_lea.vmem %s0, %s97
      %p99 = pneg %p33
      %p100 = pneg %p30
      %p101 = pneg %p59
      %p102 = pneg %p56
      %s103 = smul.u32 8, %s12
      %p104 = scmp.lt.s32.totalorder %s103, 15
      %s105 = scalar_select %p104, %s103, 15
      %s106 = smul.addr %s105, 8
      %s107 = scalar_lea.vmem %s1, %s106
      %s108 = smul.u32 8, %s12
      %p109 = scmp.lt.s32.totalorder %s108, 15
      %s110 = scalar_select %p109, %s108, 15
      %s111 = smul.addr %s110, 8
      %s112 = scalar_lea.vmem %s0, %s111
      %s113 = smul.u32 8, %s12
      %s114 = smul.u32 8, %s12
      %p115 = scmp.lt.s32.totalorder %s114, 15
      %s116 = scalar_select %p115, %s114, 15
      %s117 = smul.addr %s116, 8
      %s118 = scalar_lea.vmem %s1, %s117
      %s119 = smul.u32 8, %s12
      %v120 = vld [vmem:[%s112] sm:$0xff]
      %v121 = vld [vmem:[%s112 + $0x8] sm:$0xff]
      %v122 = vld [vmem:[%s112 + $0x10] sm:$0xff]
      %v123 = vld [vmem:[%s112 + $0x18] sm:$0xff]
      %v124 = vld [vmem:[%s112 + $0x20] sm:$0xff]
      %v125 = vld [vmem:[%s112 + $0x28] sm:$0xff]
      %v126 = vld [vmem:[%s112 + $0x30] sm:$0xff]
      %v127 = vld [vmem:[%s112 + $0x38] sm:$0xff]
      %vm128 = vcmp.le.f32.partialorder %v120, -5e+29
      %vm129 = vcmp.le.f32.partialorder %v121, -5e+29
      %vm130 = vcmp.le.f32.partialorder %v122, -5e+29
      %vm131 = vcmp.le.f32.partialorder %v123, -5e+29
      %vm132 = vcmp.le.f32.partialorder %v124, -5e+29
      %vm133 = vcmp.le.f32.partialorder %v125, -5e+29
      %vm134 = vcmp.le.f32.partialorder %v126, -5e+29
      %vm135 = vcmp.le.f32.partialorder %v127, -5e+29
      %vm136 = vcmp.ge.f32.partialorder %v120, 0.0
      %vm137 = vcmp.ge.f32.partialorder %v121, 0.0
      %vm138 = vcmp.ge.f32.partialorder %v122, 0.0
      %vm139 = vcmp.ge.f32.partialorder %v123, 0.0
      %vm140 = vcmp.ge.f32.partialorder %v124, 0.0
      %vm141 = vcmp.ge.f32.partialorder %v125, 0.0
      %vm142 = vcmp.ge.f32.partialorder %v126, 0.0
      %vm143 = vcmp.ge.f32.partialorder %v127, 0.0
      %v144 = vmul.f32 %v120, 0.2
      %v145 = vmul.f32 %v121, 0.2
      %v146 = vmul.f32 %v122, 0.2
      %v147 = vmul.f32 %v123, 0.2
      %v148 = vmul.f32 %v124, 0.2
      %v149 = vmul.f32 %v125, 0.2
      %v150 = vmul.f32 %v126, 0.2
      %v151 = vmul.f32 %v127, 0.2
      %v152 = vsel %vm136, %v120, %v144
      %v153 = vsel %vm137, %v121, %v145
      %v154 = vsel %vm138, %v122, %v146
      %v155 = vsel %vm139, %v123, %v147
      %v156 = vsel %vm140, %v124, %v148
      %v157 = vsel %vm141, %v125, %v149
      %v158 = vsel %vm142, %v126, %v150
      %v159 = vsel %vm143, %v127, %v151
      %v160 = vsel %vm128, -1e+30, %v152
      %v161 = vsel %vm129, -1e+30, %v153
      %v162 = vsel %vm130, -1e+30, %v154
      %v163 = vsel %vm131, -1e+30, %v155
      %v164 = vsel %vm132, -1e+30, %v156
      %v165 = vsel %vm133, -1e+30, %v157
      %v166 = vsel %vm134, -1e+30, %v158
      %v167 = vsel %vm135, -1e+30, %v159
      %vm168 = vcmask 64512
      %v169 = vsel %vm168, %v160, -inf
      %170 = vmax.xlane.f32.xlu0 %v169
      %v171 = vpop.xlane.xlu0 %170
      %v172 = vsel %vm168, %v161, -inf
      %173 = vmax.xlane.f32.xlu0 %v172
      %v174 = vpop.xlane.xlu0 %173
      %v175 = vsel %vm168, %v162, -inf
      %176 = vmax.xlane.f32.xlu0 %v175
      %v177 = vpop.xlane.xlu0 %176
      %v178 = vsel %vm168, %v163, -inf
      %179 = vmax.xlane.f32.xlu0 %v178
      %v180 = vpop.xlane.xlu0 %179
      %v181 = vsel %vm168, %v164, -inf
      %182 = vmax.xlane.f32.xlu0 %v181
      %v183 = vpop.xlane.xlu0 %182
      %v184 = vsel %vm168, %v165, -inf
      %185 = vmax.xlane.f32.xlu0 %v184
      %v186 = vpop.xlane.xlu0 %185
      %v187 = vsel %vm168, %v166, -inf
      %188 = vmax.xlane.f32.xlu0 %v187
      %v189 = vpop.xlane.xlu0 %188
      %v190 = vsel %vm168, %v167, -inf
      %191 = vmax.xlane.f32.xlu0 %v190
      %v192 = vpop.xlane.xlu0 %191
      %v193 = vsub.f32 %v160, %v171
      %v194 = vsub.f32 %v161, %v174
      %v195 = vsub.f32 %v162, %v177
      %v196 = vsub.f32 %v163, %v180
      %v197 = vsub.f32 %v164, %v183
      %v198 = vsub.f32 %v165, %v186
      %v199 = vsub.f32 %v166, %v189
      %v200 = vsub.f32 %v167, %v192
      %v201 = vmul.f32 %v193, 1.442695
      %v202 = vpow.pop %v201
      %v203 = vmul.f32 %v194, 1.442695
      %v204 = vpow.pop %v203
      %v205 = vmul.f32 %v195, 1.442695
      %v206 = vpow.pop %v205
      %v207 = vmul.f32 %v196, 1.442695
      %v208 = vpow.pop %v207
      %v209 = vmul.f32 %v197, 1.442695
      %v210 = vpow.pop %v209
      %v211 = vmul.f32 %v198, 1.442695
      %v212 = vpow.pop %v211
      %v213 = vmul.f32 %v199, 1.442695
      %v214 = vpow.pop %v213
      %v215 = vmul.f32 %v200, 1.442695
      %v216 = vpow.pop %v215
      %v217 = vsel %vm128, 0.0, %v202
      %v218 = vsel %vm129, 0.0, %v204
      %v219 = vsel %vm130, 0.0, %v206
      %v220 = vsel %vm131, 0.0, %v208
      %v221 = vsel %vm132, 0.0, %v210
      %v222 = vsel %vm133, 0.0, %v212
      %v223 = vsel %vm134, 0.0, %v214
      %v224 = vsel %vm135, 0.0, %v216
      %v225 = vsel %vm168, %v217, 0.0
      %226 = vadd.xlane.f32.xlu0 %v225
      %v227 = vpop.xlane.xlu0 %226
      %v228 = vsel %vm168, %v218, 0.0
      %229 = vadd.xlane.f32.xlu0 %v228
      %v230 = vpop.xlane.xlu0 %229
      %v231 = vsel %vm168, %v219, 0.0
      %232 = vadd.xlane.f32.xlu0 %v231
      %v233 = vpop.xlane.xlu0 %232
      %v234 = vsel %vm168, %v220, 0.0
      %235 = vadd.xlane.f32.xlu0 %v234
      %v236 = vpop.xlane.xlu0 %235
      %v237 = vsel %vm168, %v221, 0.0
      %238 = vadd.xlane.f32.xlu0 %v237
      %v239 = vpop.xlane.xlu0 %238
      %v240 = vsel %vm168, %v222, 0.0
      %241 = vadd.xlane.f32.xlu0 %v240
      %v242 = vpop.xlane.xlu0 %241
      %v243 = vsel %vm168, %v223, 0.0
      %244 = vadd.xlane.f32.xlu0 %v243
      %v245 = vpop.xlane.xlu0 %244
      %v246 = vsel %vm168, %v224, 0.0
      %247 = vadd.xlane.f32.xlu0 %v246
      %v248 = vpop.xlane.xlu0 %247
      %v249 = vmax.f32 %v227, 1e-30
      %v250 = vmax.f32 %v230, 1e-30
      %v251 = vmax.f32 %v233, 1e-30
      %v252 = vmax.f32 %v236, 1e-30
      %v253 = vmax.f32 %v239, 1e-30
      %v254 = vmax.f32 %v242, 1e-30
      %v255 = vmax.f32 %v245, 1e-30
      %v256 = vmax.f32 %v248, 1e-30
      %v257 = vrcp.pop %v249
      %v258 = vrcp.pop %v250
      %v259 = vrcp.pop %v251
      %v260 = vrcp.pop %v252
      %v261 = vrcp.pop %v253
      %v262 = vrcp.pop %v254
      %v263 = vrcp.pop %v255
      %v264 = vrcp.pop %v256
      %v265 = vmul.f32 %v249, %v257
      %v266 = vmul.f32 %v250, %v258
      %v267 = vmul.f32 %v251, %v259
      %v268 = vmul.f32 %v252, %v260
      %v269 = vmul.f32 %v253, %v261
      %v270 = vmul.f32 %v254, %v262
      %v271 = vmul.f32 %v255, %v263
      %v272 = vmul.f32 %v256, %v264
      %v273 = vsub.f32 2.0, %v265
      %v274 = vsub.f32 2.0, %v266
      %v275 = vsub.f32 2.0, %v267
      %v276 = vsub.f32 2.0, %v268
      %v277 = vsub.f32 2.0, %v269
      %v278 = vsub.f32 2.0, %v270
      %v279 = vsub.f32 2.0, %v271
      %v280 = vsub.f32 2.0, %v272
      %v281 = vmul.f32 %v257, %v273
      %v282 = vmul.f32 %v258, %v274
      %v283 = vmul.f32 %v259, %v275
      %v284 = vmul.f32 %v260, %v276
      %v285 = vmul.f32 %v261, %v277
      %v286 = vmul.f32 %v262, %v278
      %v287 = vmul.f32 %v263, %v279
      %v288 = vmul.f32 %v264, %v280
      %v289 = vmul.f32 %v217, %v281
      %v290 = vmul.f32 %v218, %v282
      %v291 = vmul.f32 %v219, %v283
      %v292 = vmul.f32 %v220, %v284
      %v293 = vmul.f32 %v221, %v285
      %v294 = vmul.f32 %v222, %v286
      %v295 = vmul.f32 %v223, %v287
      %v296 = vmul.f32 %v224, %v288
      %297 = vst.msk [vmem:[%s118] sm:$0xff] %vm168, %v289
      %298 = vst.msk [vmem:[%s118 + $0x8] sm:$0xff] %vm168, %v290
      %299 = vst.msk [vmem:[%s118 + $0x10] sm:$0xff] %vm168, %v291
      %300 = vst.msk [vmem:[%s118 + $0x18] sm:$0xff] %vm168, %v292
      %301 = vst.msk [vmem:[%s118 + $0x20] sm:$0xff] %vm168, %v293
      %302 = vst.msk [vmem:[%s118 + $0x28] sm:$0xff] %vm168, %v294
      %303 = vst.msk [vmem:[%s118 + $0x30] sm:$0xff] %vm168, %v295
      %304 = vst.msk [vmem:[%s118 + $0x38] sm:$0xff] %vm168, %v296
      %s305 = smul.u32 8, %s12
      %p306 = scmp.lt.s32.totalorder %s305, 15
      %s307 = scalar_select %p306, %s305, 15
      %s308 = smul.addr %s307, 8
      %s309 = scalar_lea.vmem %s1, %s308
      // Predicated region
      $region25: #{tpu_custom_call.1} parent=23 // pred_check
        %p310 = pneg %p56
      $region26: #{tpu_custom_call.1} parent=23 // pred_check_branch
        %312 = sbr.rel (%p310) target = $region28
      $region27: #{tpu_custom_call.1} parent=23 // pred_region
        %s313 = smul.u32 8, %s12
      $region28: #{tpu_custom_call.1} parent=23 // pred_fallthru
        _
    $region24: #{tpu_custom_call.1} parent=5 // pred_fallthru
      _
    %p314 = scmp.le.s32.totalorder 2, %s7
    // Predicated region
    $region29: #{tpu_custom_call.1} parent=5 // pred_check
      %p315 = pneg %p314
    $region30: #{tpu_custom_call.1} parent=5 // pred_check_branch
      %317 = sbr.rel (%p315) target = $region32
    $region31: #{tpu_custom_call.1} parent=5 // pred_region
      %s318 = ssub.s32 %s7, 2
      // Predicated region
      $region33: #{tpu_custom_call.1} parent=31 // pred_check
        %p319 = pneg %p62
      $region34: #{tpu_custom_call.1} parent=31 // pred_check_branch
        %321 = sbr.rel (%p319) target = $region36
      $region35: #{tpu_custom_call.1} parent=31 // pred_region
        %s322 = smul.u32 8, %s13
        %p323 = scmp.lt.s32.totalorder %s322, 15
        %s324 = scalar_select %p323, %s322, 15
        %s325 = smul.addr %s324, 8
        %s326 = scalar_lea.vmem %s1, %s325
      $region36: #{tpu_custom_call.1} parent=31 // pred_fallthru
        _
    $region32: #{tpu_custom_call.1} parent=5 // pred_fallthru
      _
  $region6: #{tpu_custom_call.1} parent=0 // loop_footer
    %s11 = sadd.s32 1, %s7
  $region7: #{tpu_custom_call.1} parent=0 // loop_footer_branch
    %6 = sbr.rel target = $region3
  $region8: #{tpu_custom_call.1} parent=0 // loop_exit
    _

</llo_original>
